<compile_context>
chip_gen: v6e
topology: v6e:2x2x1
jax: 0.10.0
libtpu: 0.0.40
codegen_flags: <defaults>
</compile_context>

<pallas_src>
import functools

import jax
import jax.numpy as jnp
from jax.experimental import pallas as pl
from jax.experimental.pallas import tpu as pltpu


def _round_up(n, m):
    return (n + m - 1) // m * m


def svd_linear_kernel(x_ref, vs_ref, ut_ref, b_ref, o_ref, t_ref):
    # x_ref  : (tm, in_p)  bf16  -- batch-row tile, resident across j
    # vs_ref : (in_p, r_p) bf16  -- V * S (folded), resident across whole grid
    # ut_ref : (r_p, tn)   bf16  -- U.T output-column tile
    # b_ref  : (1, tn)     f32   -- bias tile
    # o_ref  : (tm, tn)    f32   -- output tile
    # t_ref  : (tm, r_p)   f32 VMEM scratch -- t = x @ (V*S), reused across j
    @pl.when(pl.program_id(1) == 0)
    def _():
        t_ref[...] = jnp.dot(x_ref[...], vs_ref[...],
                             preferred_element_type=jnp.float32)

    out = jnp.dot(t_ref[...].astype(jnp.bfloat16), ut_ref[...],
                  preferred_element_type=jnp.float32)
    o_ref[...] = out + b_ref[...]


@functools.partial(jax.jit, static_argnames=("tm", "tn"))
def svd_linear(x, V, S, U, bias, *, tm=128, tn=128):
    """x:[B,in], V:[in,r], S:[r], U:[out,r], bias:[out] -> [B,out] (f32)."""
    B, in_f = x.shape
    out_f, r = U.shape

    # One-time weight transforms, done in f32 BEFORE the bf16 cast
    # (avoids double-rounding of the singular values).
    Vs = V.astype(jnp.float32) * S.astype(jnp.float32)[None, :]   # [in, r]
    UT = U.astype(jnp.float32).T                                  # [r, out]

    # Pad every dim to TPU-friendly multiples (lane / MXU granularity 128).
    Bp = _round_up(B, tm)
    inp = _round_up(in_f, 128)
    rp = _round_up(r, 128)
    outp = _round_up(out_f, tn)

    x_p = jnp.pad(x.astype(jnp.float32),
                  ((0, Bp - B), (0, inp - in_f))).astype(jnp.bfloat16)
    vs_p = jnp.pad(Vs, ((0, inp - in_f), (0, rp - r))).astype(jnp.bfloat16)
    ut_p = jnp.pad(UT, ((0, rp - r), (0, outp - out_f))).astype(jnp.bfloat16)
    b_p = jnp.pad(bias.astype(jnp.float32), (0, outp - out_f)).reshape(1, outp)

    grid = (Bp // tm, outp // tn)
    flops = 2 * Bp * inp * rp + 2 * Bp * rp * outp
    bytes_accessed = ((x_p.size + vs_p.size + ut_p.size) * 2
                      + (b_p.size + Bp * outp) * 4)

    out_p = pl.pallas_call(
        svd_linear_kernel,
        out_shape=jax.ShapeDtypeStruct((Bp, outp), jnp.float32),
        grid_spec=pltpu.PrefetchScalarGridSpec(
            num_scalar_prefetch=0,
            grid=grid,
            in_specs=[
                pl.BlockSpec((tm, inp), lambda i, j: (i, 0)),   # x row tile
                pl.BlockSpec((inp, rp), lambda i, j: (0, 0)),   # Vs resident
                pl.BlockSpec((rp, tn), lambda i, j: (0, j)),    # U.T col tile
                pl.BlockSpec((1, tn), lambda i, j: (0, j)),     # bias tile
            ],
            out_specs=pl.BlockSpec((tm, tn), lambda i, j: (i, j)),
            scratch_shapes=[pltpu.VMEM((tm, rp), jnp.float32)],
        ),
        compiler_params=pltpu.CompilerParams(
            dimension_semantics=("parallel", "arbitrary"),
            vmem_limit_bytes=64 * 1024 * 1024,
        ),
        cost_estimate=pl.CostEstimate(
            flops=flops, transcendentals=0, bytes_accessed=bytes_accessed),
    )(x_p, vs_p, ut_p, b_p)

    return out_p[:B, :out_f]


def make_svd_linear_params(key, in_features, out_features, rank_ratio=0.5):
    """Deterministic synthetic init mirroring SVDLinear.__init__."""
    kw, kb = jax.random.split(key)
    # nn.Linear weight is [out_features, in_features]
    bound = 1.0 / jnp.sqrt(in_features)
    W = jax.random.uniform(kw, (out_features, in_features),
                           minval=-bound, maxval=bound, dtype=jnp.float32)
    bias = jax.random.uniform(kb, (out_features,),
                              minval=-bound, maxval=bound, dtype=jnp.float32)
    # torch.svd(W): W = U @ diag(S) @ V.T with U:[out, k], V:[in, k]
    Uf, Sf, Vh = jnp.linalg.svd(W, full_matrices=False)
    Vf = Vh.T
    full_rank = min(in_features, out_features)
    reduced_rank = max(1, int(full_rank * rank_ratio))
    U = Uf[:, :reduced_rank]          # [out, r]
    S = Sf[:reduced_rank]             # [r]
    V = Vf[:, :reduced_rank]          # [in, r]
    return U, S, V, bias


if __name__ == "__main__":
    key = jax.random.PRNGKey(0)
    k_x, k_p = jax.random.split(key)

    batch, in_features, out_features = 16, 32, 16
    rank_ratio = 0.5

    U, S, V, bias = make_svd_linear_params(k_p, in_features, out_features,
                                           rank_ratio)
    x = jax.random.normal(k_x, (batch, in_features), dtype=jnp.float32)

    out = svd_linear(x, V, S, U, bias)
    out = jax.block_until_ready(out)

    # Pure-JAX f32 reference (same math as the PyTorch forward).
    ref = x @ V @ jnp.diag(S) @ U.T + bias
    assert out.shape == (batch, out_features)
    # bf16 operands with f32 accumulation -> loose-ish tolerance vs f32 ref.
    assert jnp.allclose(out, ref, atol=2e-2, rtol=2e-2), float(
        jnp.max(jnp.abs(out - ref)))

    print("KERNEL_OK")
</pallas_src>

<mosaic_0001>
module attributes {stable_mosaic.version = 11 : i64} {
  func.func @svd_linear_kernel(%arg0: i32, %arg1: i32, %arg2: memref<128x128xbf16, #tpu.memory_space<vmem>>, %arg3: memref<128x128xbf16, #tpu.memory_space<vmem>>, %arg4: memref<128x128xbf16, #tpu.memory_space<vmem>>, %arg5: memref<1x128xf32, #tpu.memory_space<vmem>>, %arg6: memref<128x128xf32, #tpu.memory_space<vmem>>, %arg7: memref<128x128xf32, #tpu.memory_space<vmem>>) attributes {dimension_semantics = [#tpu.dimension_semantics<parallel>, #tpu.dimension_semantics<arbitrary>], iteration_bounds = array<i64: 1, 1>, scalar_prefetch = 0 : i64, scratch_operands = 1 : i64, tpu.core_type = #tpu.core_type<tc>, window_params = [{transform_indices = @transform_0, window_bounds = array<i64: 128, 128>}, {pipeline_mode = #tpu.pipeline_mode<synchronous>, transform_indices = @transform_1, window_bounds = array<i64: 128, 128>}, {transform_indices = @transform_2, window_bounds = array<i64: 128, 128>}, {transform_indices = @transform_3, window_bounds = array<i64: 1, 128>}, {transform_indices = @transform_4, window_bounds = array<i64: 128, 128>}]} {
    %c0_i32 = arith.constant 0 : i32
    %0 = arith.cmpi eq, %arg1, %c0_i32 : i32
    %1 = arith.extui %0 : i1 to i32
    %c0_i32_0 = arith.constant 0 : i32
    %2 = arith.cmpi ne, %1, %c0_i32_0 : i32
    scf.if %2 {
      %c0_8 = arith.constant 0 : index
      %c0_9 = arith.constant 0 : index
      %11 = vector.load %arg2[%c0_8, %c0_9] : memref<128x128xbf16, #tpu.memory_space<vmem>>, vector<128x128xbf16>
      %c0_10 = arith.constant 0 : index
      %c0_11 = arith.constant 0 : index
      %12 = vector.load %arg3[%c0_10, %c0_11] : memref<128x128xbf16, #tpu.memory_space<vmem>>, vector<128x128xbf16>
      %cst_12 = arith.constant dense<0.000000e+00> : vector<128x128xf32>
      %13 = tpu.matmul %11, %12, %cst_12 {dimension_numbers = #tpu.dot_dimension_numbers<[1], [0], [0], [1], [0, 0, 1, 1], [], []>} : vector<128x128xbf16>, vector<128x128xbf16>, vector<128x128xf32> -> vector<128x128xf32>
      %c0_13 = arith.constant 0 : index
      %c0_14 = arith.constant 0 : index
      %14 = vector.load %arg7[%c0_13, %c0_14] : memref<128x128xf32, #tpu.memory_space<vmem>>, vector<128x128xf32>
      tpu.vector_store %arg7[%c0_13, %c0_14], %13 {strides = array<i32>} : memref<128x128xf32, #tpu.memory_space<vmem>>, vector<128x128xf32>,
    } else {
    }
    %c0 = arith.constant 0 : index
    %c0_1 = arith.constant 0 : index
    %3 = vector.load %arg7[%c0, %c0_1] : memref<128x128xf32, #tpu.memory_space<vmem>>, vector<128x128xf32>
    %4 = arith.truncf %3 : vector<128x128xf32> to vector<128x128xbf16>
    %c0_2 = arith.constant 0 : index
    %c0_3 = arith.constant 0 : index
    %5 = vector.load %arg4[%c0_2, %c0_3] : memref<128x128xbf16, #tpu.memory_space<vmem>>, vector<128x128xbf16>
    %cst = arith.constant dense<0.000000e+00> : vector<128x128xf32>
    %6 = tpu.matmul %4, %5, %cst {dimension_numbers = #tpu.dot_dimension_numbers<[1], [0], [0], [1], [0, 0, 1, 1], [], []>} : vector<128x128xbf16>, vector<128x128xbf16>, vector<128x128xf32> -> vector<128x128xf32>
    %c0_4 = arith.constant 0 : index
    %c0_5 = arith.constant 0 : index
    %7 = vector.load %arg5[%c0_4, %c0_5] : memref<1x128xf32, #tpu.memory_space<vmem>>, vector<1x128xf32>
    %8 = vector.broadcast %7 : vector<1x128xf32> to vector<128x128xf32>
    %9 = arith.addf %6, %8 : vector<128x128xf32>
    %c0_6 = arith.constant 0 : index
    %c0_7 = arith.constant 0 : index
    %10 = vector.load %arg6[%c0_6, %c0_7] : memref<128x128xf32, #tpu.memory_space<vmem>>, vector<128x128xf32>
    tpu.vector_store %arg6[%c0_6, %c0_7], %9 {strides = array<i32>} : memref<128x128xf32, #tpu.memory_space<vmem>>, vector<128x128xf32>,
    return
  }
  func.func @transform_0(%arg0: i32, %arg1: i32) -> (i32, i32) {
    %c0_i32 = arith.constant 0 : i32
    %c0_i32_0 = arith.constant 0 : i32
    return %arg0, %c0_i32 : i32, i32
  }
  func.func @transform_1(%arg0: i32, %arg1: i32) -> (i32, i32) {
    %c0_i32 = arith.constant 0 : i32
    %c0_i32_0 = arith.constant 0 : i32
    %c0_i32_1 = arith.constant 0 : i32
    return %c0_i32, %c0_i32_0 : i32, i32
  }
  func.func @transform_2(%arg0: i32, %arg1: i32) -> (i32, i32) {
    %c0_i32 = arith.constant 0 : i32
    %c0_i32_0 = arith.constant 0 : i32
    return %c0_i32, %arg1 : i32, i32
  }
  func.func @transform_3(%arg0: i32, %arg1: i32) -> (i32, i32) {
    %c0_i32 = arith.constant 0 : i32
    %c0_i32_0 = arith.constant 0 : i32
    return %c0_i32, %arg1 : i32, i32
  }
  func.func @transform_4(%arg0: i32, %arg1: i32) -> (i32, i32) {
    %c0_i32 = arith.constant 0 : i32
    return %arg0, %arg1 : i32, i32
  }
}

</mosaic_0001>

<llo_original>
// kernel: svd_linear.1
$region0: #{svd_linear.1}
  #allocation0 [shape = 'u32[]', space=smem, size = 0x4, offset = 0x4, fixed_abs, tag = 'smem constant byte address 0x4 - core index']
  #allocation1 [shape = 'u32[144,128]{1,0:T(1,128)}', space=vmem, size = 0x12000, scoped, tag = 'internal scratch']
  #allocation2 [shape = 'f32[128,128]{1,0:T(8,128)}', space=vmem, size = 0x10000, scoped, tag = 'scratch operand']
  %s0 = inlined_call_operand.vmem [shape: bf16[128,128], index: 0, kind: input, shape index: {}]
  %s1 = inlined_call_operand.vmem [shape: bf16[128,128], index: 1, kind: input, shape index: {}]
  %s2 = inlined_call_operand.vmem [shape: bf16[128,128], index: 2, kind: input, shape index: {}]
  %s3 = inlined_call_operand.vmem [shape: f32[1,128], index: 3, kind: input, shape index: {}]
  %s4 = inlined_call_operand.vmem [shape: f32[128,128], index: 4, kind: output, shape index: {}]
  %s5 = sld [smem:[#allocation0]]
  $region30: #{svd_linear.1} parent=0
    _
  %s7 = ssub.s32 1, %s5
  %s8 = scalar_select 0, %s7, %s5
  // Predicated region
  $region2: #{svd_linear.1} parent=0 // pred_check
    _
  $region3: #{svd_linear.1} parent=0 // pred_check_branch
    %10 = sbr.rel (0) target = $region5
  $region4: #{svd_linear.1} parent=0 // pred_region
    _
  $region5: #{svd_linear.1} parent=0 // pred_fallthru
    _
  // Predicated region
  $region6: #{svd_linear.1} parent=0 // pred_check
    _
  $region7: #{svd_linear.1} parent=0 // pred_check_branch
    %12 = sbr.rel (0) target = $region9
  $region8: #{svd_linear.1} parent=0 // pred_region
    _
  $region9: #{svd_linear.1} parent=0 // pred_fallthru
    _
  // Predicated region
  $region10: #{svd_linear.1} parent=0 // pred_check
    _
  $region11: #{svd_linear.1} parent=0 // pred_check_branch
    %14 = sbr.rel (0) target = $region13
  $region12: #{svd_linear.1} parent=0 // pred_region
    _
  $region13: #{svd_linear.1} parent=0 // pred_fallthru
    _
  // Predicated region
  $region14: #{svd_linear.1} parent=0 // pred_check
    _
  $region15: #{svd_linear.1} parent=0 // pred_check_branch
    %16 = sbr.rel (0) target = $region17
  $region16: #{svd_linear.1} parent=0 // pred_region
    _
  $region17: #{svd_linear.1} parent=0 // pred_fallthru
    _
  %p18 = scmp.eq.s32.totalorder 0, 0
  // Predicated region
  $region18: #{svd_linear.1} parent=0 // pred_check
    %p19 = pneg %p18
  $region19: #{svd_linear.1} parent=0 // pred_check_branch
    %21 = sbr.rel (%p19) target = $region21
  $region20: #{svd_linear.1} parent=0 // pred_region
    %v22 = vld [vmem:[%s0] sm:$0xf]
    %v23 = vld [vmem:[%s0 + $0x4] sm:$0xf]
    %v24 = vld [vmem:[%s0 + $0x8] sm:$0xf]
    %v25 = vld [vmem:[%s0 + $0xc] sm:$0xf]
    %v26 = vld [vmem:[%s0 + $0x10] sm:$0xf]
    %v27 = vld [vmem:[%s0 + $0x14] sm:$0xf]
    %v28 = vld [vmem:[%s0 + $0x18] sm:$0xf]
    %v29 = vld [vmem:[%s0 + $0x1c] sm:$0xf]
    %v30 = vld [vmem:[%s0 + $0x20] sm:$0xf]
    %v31 = vld [vmem:[%s0 + $0x24] sm:$0xf]
    %v32 = vld [vmem:[%s0 + $0x28] sm:$0xf]
    %v33 = vld [vmem:[%s0 + $0x2c] sm:$0xf]
    %v34 = vld [vmem:[%s0 + $0x30] sm:$0xf]
    %v35 = vld [vmem:[%s0 + $0x34] sm:$0xf]
    %v36 = vld [vmem:[%s0 + $0x38] sm:$0xf]
    %v37 = vld [vmem:[%s0 + $0x3c] sm:$0xf]
    %v38 = vld [vmem:[%s1] sm:$0xf]
    %v39 = vld [vmem:[%s1 + $0x4] sm:$0xf]
    %v40 = vld [vmem:[%s1 + $0x8] sm:$0xf]
    %v41 = vld [vmem:[%s1 + $0xc] sm:$0xf]
    %v42 = vld [vmem:[%s1 + $0x10] sm:$0xf]
    %v43 = vld [vmem:[%s1 + $0x14] sm:$0xf]
    %v44 = vld [vmem:[%s1 + $0x18] sm:$0xf]
    %v45 = vld [vmem:[%s1 + $0x1c] sm:$0xf]
    %v46 = vld [vmem:[%s1 + $0x20] sm:$0xf]
    %v47 = vld [vmem:[%s1 + $0x24] sm:$0xf]
    %v48 = vld [vmem:[%s1 + $0x28] sm:$0xf]
    %v49 = vld [vmem:[%s1 + $0x2c] sm:$0xf]
    %v50 = vld [vmem:[%s1 + $0x30] sm:$0xf]
    %v51 = vld [vmem:[%s1 + $0x34] sm:$0xf]
    %v52 = vld [vmem:[%s1 + $0x38] sm:$0xf]
    %v53 = vld [vmem:[%s1 + $0x3c] sm:$0xf]
    %v70 = vunpack.c.l.b16 %v22
    %v71 = vunpack.c.l.b16 %v23
    %v72 = vunpack.c.l.b16 %v24
    %v73 = vunpack.c.l.b16 %v25
    %v74 = vunpack.c.l.b16 %v26
    %v75 = vunpack.c.l.b16 %v27
    %v76 = vunpack.c.l.b16 %v28
    %v77 = vunpack.c.l.b16 %v29
    %v78 = vunpack.c.l.b16 %v30
    %v79 = vunpack.c.l.b16 %v31
    %v80 = vunpack.c.l.b16 %v32
    %v81 = vunpack.c.l.b16 %v33
    %v82 = vunpack.c.l.b16 %v34
    %v83 = vunpack.c.l.b16 %v35
    %v84 = vunpack.c.l.b16 %v36
    %v85 = vunpack.c.l.b16 %v37
    %v86 = vpack.c.b16 %v71, %v70
    %v87 = vpack.c.b16 %v73, %v72
    %v88 = vpack.c.b16 %v75, %v74
    %v89 = vpack.c.b16 %v77, %v76
    %v90 = vpack.c.b16 %v79, %v78
    %v91 = vpack.c.b16 %v81, %v80
    %v92 = vpack.c.b16 %v83, %v82
    %v93 = vpack.c.b16 %v85, %v84
    %v118 = vunpack.c.l.b16 %v38
    %v119 = vunpack.c.l.b16 %v39
    %v120 = vunpack.c.l.b16 %v40
    %v121 = vunpack.c.l.b16 %v41
    %v122 = vunpack.c.l.b16 %v42
    %v123 = vunpack.c.l.b16 %v43
    %v124 = vunpack.c.l.b16 %v44
    %v125 = vunpack.c.l.b16 %v45
    %v126 = vunpack.c.l.b16 %v46
    %v127 = vunpack.c.l.b16 %v47
    %v128 = vunpack.c.l.b16 %v48
    %v129 = vunpack.c.l.b16 %v49
    %v130 = vunpack.c.l.b16 %v50
    %v131 = vunpack.c.l.b16 %v51
    %v132 = vunpack.c.l.b16 %v52
    %v133 = vunpack.c.l.b16 %v53
    %v134 = vpack.c.b16 %v119, %v118
    %v135 = vpack.c.b16 %v121, %v120
    %v136 = vpack.c.b16 %v123, %v122
    %v137 = vpack.c.b16 %v125, %v124
    %v138 = vpack.c.b16 %v127, %v126
    %v139 = vpack.c.b16 %v129, %v128
    %v140 = vpack.c.b16 %v131, %v130
    %v141 = vpack.c.b16 %v133, %v132
    %150 = vmatprep.subr.bf16.mxu0 0
    %151 = vmatpush1.bf16.msra.mxu0 %v141
    %152 = vmatprep.subr.bf16.mxu0 0
    %153 = vmatpush1.bf16.msra.mxu0 %v140
    %154 = vmatprep.subr.bf16.mxu0 0
    %155 = vmatpush1.bf16.msra.mxu0 %v139
    %156 = vmatprep.subr.bf16.mxu0 0
    %157 = vmatpush1.bf16.msra.mxu0 %v138
    %158 = vmatprep.subr.bf16.mxu0 0
    %159 = vmatpush1.bf16.msra.mxu0 %v137
    %160 = vmatprep.subr.bf16.mxu0 0
    %161 = vmatpush1.bf16.msra.mxu0 %v136
    %162 = vmatprep.subr.bf16.mxu0 0
    %163 = vmatpush1.bf16.msra.mxu0 %v135
    %164 = vmatprep.subr.bf16.mxu0 0
    %165 = vmatpush1.bf16.msra.mxu0 %v134
    %166 = vmatprep.subr.bf16.mxu0 0
    %167 = vmatpush2.bf16.msra.mxu0 0
    %168 = vmatprep.subr.bf16.mxu0 0
    %169 = vmatpush2.bf16.msra.mxu0 0
    %170 = vmatprep.subr.bf16.mxu0 0
    %171 = vmatpush2.bf16.msra.mxu0 0
    %172 = vmatprep.subr.bf16.mxu0 0
    %173 = vmatpush2.bf16.msra.mxu0 0
    %174 = vmatprep.subr.bf16.mxu0 0
    %175 = vmatpush2.bf16.msra.mxu0 0
    %176 = vmatprep.subr.bf16.mxu0 0
    %177 = vmatpush2.bf16.msra.mxu0 0
    %178 = vmatprep.subr.bf16.mxu0 0
    %179 = vmatpush2.bf16.msra.mxu0 0
    %180 = vmatprep.subr.bf16.mxu0 0
    %181 = vmatpush2.bf16.msra.mxu0 0
    %182 = vmatprep.mubr.bf16.mxu0 0
    %183 = vmatmul.mubr.bf16.gmra.mxu0 %v86
    %v184 = vpop.f32.mrf.mxu0
    %v185 = vadd.f32 0.0, %v184
    %v186 = vpop.f32.mrf.mxu0
    %v187 = vpop.f32.mrf.mxu0
    %v188 = vadd.f32 0.0, %v187
    %v189 = vpop.f32.mrf.mxu0
    %190 = vmatprep.mubr.bf16.mxu0 0
    %191 = vmatmul.mubr.bf16.gmra.mxu0 %v87
    %v192 = vpop.f32.mrf.mxu0
    %v193 = vadd.f32 0.0, %v192
    %v194 = vpop.f32.mrf.mxu0
    %v195 = vpop.f32.mrf.mxu0
    %v196 = vadd.f32 0.0, %v195
    %v197 = vpop.f32.mrf.mxu0
    %198 = vmatprep.mubr.bf16.mxu0 0
    %199 = vmatmul.mubr.bf16.gmra.mxu0 %v88
    %v200 = vpop.f32.mrf.mxu0
    %v201 = vadd.f32 0.0, %v200
    %v202 = vpop.f32.mrf.mxu0
    %v203 = vpop.f32.mrf.mxu0
    %v204 = vadd.f32 0.0, %v203
    %v205 = vpop.f32.mrf.mxu0
    %206 = vmatprep.mubr.bf16.mxu0 0
    %207 = vmatmul.mubr.bf16.gmra.mxu0 %v89
    %v208 = vpop.f32.mrf.mxu0
    %v209 = vadd.f32 0.0, %v208
    %v210 = vpop.f32.mrf.mxu0
    %v211 = vpop.f32.mrf.mxu0
    %v212 = vadd.f32 0.0, %v211
    %v213 = vpop.f32.mrf.mxu0
    %214 = vmatprep.mubr.bf16.mxu0 0
    %215 = vmatmul.mubr.bf16.gmra.mxu0 %v90
    %v216 = vpop.f32.mrf.mxu0
    %v217 = vadd.f32 0.0, %v216
    %v218 = vpop.f32.mrf.mxu0
    %v219 = vpop.f32.mrf.mxu0
    %v220 = vadd.f32 0.0, %v219
    %v221 = vpop.f32.mrf.mxu0
    %222 = vmatprep.mubr.bf16.mxu0 0
    %223 = vmatmul.mubr.bf16.gmra.mxu0 %v91
    %v224 = vpop.f32.mrf.mxu0
    %v225 = vadd.f32 0.0, %v224
    %v226 = vpop.f32.mrf.mxu0
    %v227 = vpop.f32.mrf.mxu0
    %v228 = vadd.f32 0.0, %v227
    %v229 = vpop.f32.mrf.mxu0
    %230 = vmatprep.mubr.bf16.mxu0 0
    %231 = vmatmul.mubr.bf16.gmra.mxu0 %v92
    %v232 = vpop.f32.mrf.mxu0
    %v233 = vadd.f32 0.0, %v232
    %v234 = vpop.f32.mrf.mxu0
    %v235 = vpop.f32.mrf.mxu0
    %v236 = vadd.f32 0.0, %v235
    %v237 = vpop.f32.mrf.mxu0
    %238 = vmatprep.mubr.bf16.mxu0 0
    %239 = vmatmul.mubr.bf16.gmra.mxu0 %v93
    %v240 = vpop.f32.mrf.mxu0
    %v241 = vadd.f32 0.0, %v240
    %v242 = vpop.f32.mrf.mxu0
    %v243 = vpop.f32.mrf.mxu0
    %v244 = vadd.f32 0.0, %v243
    %v245 = vpop.f32.mrf.mxu0
    %246 = vdwg.mxu0
    %247 = vst [vmem:[#allocation2] sm:$0xff] %v185
    %248 = vst [vmem:[#allocation2 + $0x8] sm:$0xff] %v188
    %249 = vst [vmem:[#allocation2 + $0x10] sm:$0xff] %v193
    %250 = vst [vmem:[#allocation2 + $0x18] sm:$0xff] %v196
    %251 = vst [vmem:[#allocation2 + $0x20] sm:$0xff] %v201
    %252 = vst [vmem:[#allocation2 + $0x28] sm:$0xff] %v204
    %253 = vst [vmem:[#allocation2 + $0x30] sm:$0xff] %v209
    %254 = vst [vmem:[#allocation2 + $0x38] sm:$0xff] %v212
    %255 = vst [vmem:[#allocation2 + $0x40] sm:$0xff] %v217
    %256 = vst [vmem:[#allocation2 + $0x48] sm:$0xff] %v220
    %257 = vst [vmem:[#allocation2 + $0x50] sm:$0xff] %v225
    %258 = vst [vmem:[#allocation2 + $0x58] sm:$0xff] %v228
    %259 = vst [vmem:[#allocation2 + $0x60] sm:$0xff] %v233
    %260 = vst [vmem:[#allocation2 + $0x68] sm:$0xff] %v236
    %261 = vst [vmem:[#allocation2 + $0x70] sm:$0xff] %v241
    %262 = vst [vmem:[#allocation2 + $0x78] sm:$0xff] %v244
  $region21: #{svd_linear.1} parent=0 // pred_fallthru
    _
  %v263 = vld [vmem:[#allocation2] sm:$0xff]
  %v264 = vld [vmem:[#allocation2 + $0x8] sm:$0xff]
  %v265 = vld [vmem:[#allocation2 + $0x10] sm:$0xff]
  %v266 = vld [vmem:[#allocation2 + $0x18] sm:$0xff]
  %v267 = vld [vmem:[#allocation2 + $0x20] sm:$0xff]
  %v268 = vld [vmem:[#allocation2 + $0x28] sm:$0xff]
  %v269 = vld [vmem:[#allocation2 + $0x30] sm:$0xff]
  %v270 = vld [vmem:[#allocation2 + $0x38] sm:$0xff]
  %v271 = vld [vmem:[#allocation2 + $0x40] sm:$0xff]
  %v272 = vld [vmem:[#allocation2 + $0x48] sm:$0xff]
  %v273 = vld [vmem:[#allocation2 + $0x50] sm:$0xff]
  %v274 = vld [vmem:[#allocation2 + $0x58] sm:$0xff]
  %v275 = vld [vmem:[#allocation2 + $0x60] sm:$0xff]
  %v276 = vld [vmem:[#allocation2 + $0x68] sm:$0xff]
  %v277 = vld [vmem:[#allocation2 + $0x70] sm:$0xff]
  %v278 = vld [vmem:[#allocation2 + $0x78] sm:$0xff]
  %v279 = vpack.c.bf16 %v264, %v263
  %v280 = vpack.c.bf16 %v266, %v265
  %v281 = vpack.c.bf16 %v268, %v267
  %v282 = vpack.c.bf16 %v270, %v269
  %v283 = vpack.c.bf16 %v272, %v271
  %v284 = vpack.c.bf16 %v274, %v273
  %v285 = vpack.c.bf16 %v276, %v275
  %v286 = vpack.c.bf16 %v278, %v277
  %v287 = vld [vmem:[%s2] sm:$0xf]
  %v288 = vld [vmem:[%s2 + $0x4] sm:$0xf]
  %v289 = vld [vmem:[%s2 + $0x8] sm:$0xf]
  %v290 = vld [vmem:[%s2 + $0xc] sm:$0xf]
  %v291 = vld [vmem:[%s2 + $0x10] sm:$0xf]
  %v292 = vld [vmem:[%s2 + $0x14] sm:$0xf]
  %v293 = vld [vmem:[%s2 + $0x18] sm:$0xf]
  %v294 = vld [vmem:[%s2 + $0x1c] sm:$0xf]
  %v295 = vld [vmem:[%s2 + $0x20] sm:$0xf]
  %v296 = vld [vmem:[%s2 + $0x24] sm:$0xf]
  %v297 = vld [vmem:[%s2 + $0x28] sm:$0xf]
  %v298 = vld [vmem:[%s2 + $0x2c] sm:$0xf]
  %v299 = vld [vmem:[%s2 + $0x30] sm:$0xf]
  %v300 = vld [vmem:[%s2 + $0x34] sm:$0xf]
  %v301 = vld [vmem:[%s2 + $0x38] sm:$0xf]
  %v302 = vld [vmem:[%s2 + $0x3c] sm:$0xf]
  %v303 = vld [vmem:[%s3] sm:$0x1]
  %v305 = vlaneseq
  %v306 = vshrl.u32 %v305, 7
  %v307 = vsub.s32 0, %v306
  %v308 = vrot.slane %v303, %v307
  %v326 = vunpack.c.l.b16 %v287
  %v327 = vunpack.c.l.b16 %v288
  %v328 = vunpack.c.l.b16 %v289
  %v329 = vunpack.c.l.b16 %v290
  %v330 = vunpack.c.l.b16 %v291
  %v331 = vunpack.c.l.b16 %v292
  %v332 = vunpack.c.l.b16 %v293
  %v333 = vunpack.c.l.b16 %v294
  %v334 = vunpack.c.l.b16 %v295
  %v335 = vunpack.c.l.b16 %v296
  %v336 = vunpack.c.l.b16 %v297
  %v337 = vunpack.c.l.b16 %v298
  %v338 = vunpack.c.l.b16 %v299
  %v339 = vunpack.c.l.b16 %v300
  %v340 = vunpack.c.l.b16 %v301
  %v341 = vunpack.c.l.b16 %v302
  %v342 = vpack.c.b16 %v327, %v326
  %v343 = vpack.c.b16 %v329, %v328
  %v344 = vpack.c.b16 %v331, %v330
  %v345 = vpack.c.b16 %v333, %v332
  %v346 = vpack.c.b16 %v335, %v334
  %v347 = vpack.c.b16 %v337, %v336
  %v348 = vpack.c.b16 %v339, %v338
  %v349 = vpack.c.b16 %v341, %v340
  %358 = vmatprep.subr.bf16.mxu0 0
  %359 = vmatpush1.bf16.msra.mxu0 %v349
  %360 = vmatprep.subr.bf16.mxu0 0
  %361 = vmatpush1.bf16.msra.mxu0 %v348
  %362 = vmatprep.subr.bf16.mxu0 0
  %363 = vmatpush1.bf16.msra.mxu0 %v347
  %364 = vmatprep.subr.bf16.mxu0 0
  %365 = vmatpush1.bf16.msra.mxu0 %v346
  %366 = vmatprep.subr.bf16.mxu0 0
  %367 = vmatpush1.bf16.msra.mxu0 %v345
  %368 = vmatprep.subr.bf16.mxu0 0
  %369 = vmatpush1.bf16.msra.mxu0 %v344
  %370 = vmatprep.subr.bf16.mxu0 0
  %371 = vmatpush1.bf16.msra.mxu0 %v343
  %372 = vmatprep.subr.bf16.mxu0 0
  %373 = vmatpush1.bf16.msra.mxu0 %v342
  %374 = vmatprep.subr.bf16.mxu0 0
  %375 = vmatpush2.bf16.msra.mxu0 0
  %376 = vmatprep.subr.bf16.mxu0 0
  %377 = vmatpush2.bf16.msra.mxu0 0
  %378 = vmatprep.subr.bf16.mxu0 0
  %379 = vmatpush2.bf16.msra.mxu0 0
  %380 = vmatprep.subr.bf16.mxu0 0
  %381 = vmatpush2.bf16.msra.mxu0 0
  %382 = vmatprep.subr.bf16.mxu0 0
  %383 = vmatpush2.bf16.msra.mxu0 0
  %384 = vmatprep.subr.bf16.mxu0 0
  %385 = vmatpush2.bf16.msra.mxu0 0
  %386 = vmatprep.subr.bf16.mxu0 0
  %387 = vmatpush2.bf16.msra.mxu0 0
  %388 = vmatprep.subr.bf16.mxu0 0
  %389 = vmatpush2.bf16.msra.mxu0 0
  %390 = vmatprep.mubr.bf16.mxu0 0
  %391 = vmatmul.mubr.bf16.gmra.mxu0 %v279
  %v392 = vpop.f32.mrf.mxu0
  %v393 = vadd.f32 %v308, %v392
  %v394 = vpop.f32.mrf.mxu0
  %v395 = vpop.f32.mrf.mxu0
  %v396 = vadd.f32 %v308, %v395
  %v397 = vpop.f32.mrf.mxu0
  %398 = vmatprep.mubr.bf16.mxu0 0
  %399 = vmatmul.mubr.bf16.gmra.mxu0 %v280
  %v400 = vpop.f32.mrf.mxu0
  %v401 = vadd.f32 %v308, %v400
  %v402 = vpop.f32.mrf.mxu0
  %v403 = vpop.f32.mrf.mxu0
  %v404 = vadd.f32 %v308, %v403
  %v405 = vpop.f32.mrf.mxu0
  %406 = vmatprep.mubr.bf16.mxu0 0
  %407 = vmatmul.mubr.bf16.gmra.mxu0 %v281
  %v408 = vpop.f32.mrf.mxu0
  %v409 = vadd.f32 %v308, %v408
  %v410 = vpop.f32.mrf.mxu0
  %v411 = vpop.f32.mrf.mxu0
  %v412 = vadd.f32 %v308, %v411
  %v413 = vpop.f32.mrf.mxu0
  %414 = vmatprep.mubr.bf16.mxu0 0
  %415 = vmatmul.mubr.bf16.gmra.mxu0 %v282
  %v416 = vpop.f32.mrf.mxu0
  %v417 = vadd.f32 %v308, %v416
  %v418 = vpop.f32.mrf.mxu0
  %v419 = vpop.f32.mrf.mxu0
  %v420 = vadd.f32 %v308, %v419
  %v421 = vpop.f32.mrf.mxu0
  %422 = vmatprep.mubr.bf16.mxu0 0
  %423 = vmatmul.mubr.bf16.gmra.mxu0 %v283
  %v424 = vpop.f32.mrf.mxu0
  %v425 = vadd.f32 %v308, %v424
  %v426 = vpop.f32.mrf.mxu0
  %v427 = vpop.f32.mrf.mxu0
  %v428 = vadd.f32 %v308, %v427
  %v429 = vpop.f32.mrf.mxu0
  %430 = vmatprep.mubr.bf16.mxu0 0
  %431 = vmatmul.mubr.bf16.gmra.mxu0 %v284
  %v432 = vpop.f32.mrf.mxu0
  %v433 = vadd.f32 %v308, %v432
  %v434 = vpop.f32.mrf.mxu0
  %v435 = vpop.f32.mrf.mxu0
  %v436 = vadd.f32 %v308, %v435
  %v437 = vpop.f32.mrf.mxu0
  %438 = vmatprep.mubr.bf16.mxu0 0
  %439 = vmatmul.mubr.bf16.gmra.mxu0 %v285
  %v440 = vpop.f32.mrf.mxu0
  %v441 = vadd.f32 %v308, %v440
  %v442 = vpop.f32.mrf.mxu0
  %v443 = vpop.f32.mrf.mxu0
  %v444 = vadd.f32 %v308, %v443
  %v445 = vpop.f32.mrf.mxu0
  %446 = vmatprep.mubr.bf16.mxu0 0
  %447 = vmatmul.mubr.bf16.gmra.mxu0 %v286
  %v448 = vpop.f32.mrf.mxu0
  %v449 = vadd.f32 %v308, %v448
  %v450 = vpop.f32.mrf.mxu0
  %v451 = vpop.f32.mrf.mxu0
  %v452 = vadd.f32 %v308, %v451
  %v453 = vpop.f32.mrf.mxu0
  %454 = vdwg.mxu0
  %455 = vst [vmem:[%s4] sm:$0xff] %v393
  %456 = vst [vmem:[%s4 + $0x8] sm:$0xff] %v396
  %457 = vst [vmem:[%s4 + $0x10] sm:$0xff] %v401
  %458 = vst [vmem:[%s4 + $0x18] sm:$0xff] %v404
  %459 = vst [vmem:[%s4 + $0x20] sm:$0xff] %v409
  %460 = vst [vmem:[%s4 + $0x28] sm:$0xff] %v412
  %461 = vst [vmem:[%s4 + $0x30] sm:$0xff] %v417
  %462 = vst [vmem:[%s4 + $0x38] sm:$0xff] %v420
  %463 = vst [vmem:[%s4 + $0x40] sm:$0xff] %v425
  %464 = vst [vmem:[%s4 + $0x48] sm:$0xff] %v428
  %465 = vst [vmem:[%s4 + $0x50] sm:$0xff] %v433
  %466 = vst [vmem:[%s4 + $0x58] sm:$0xff] %v436
  %467 = vst [vmem:[%s4 + $0x60] sm:$0xff] %v441
  %468 = vst [vmem:[%s4 + $0x68] sm:$0xff] %v444
  %469 = vst [vmem:[%s4 + $0x70] sm:$0xff] %v449
  %470 = vst [vmem:[%s4 + $0x78] sm:$0xff] %v452
  // Predicated region
  $region22: #{svd_linear.1} parent=0 // pred_check
    _
  $region23: #{svd_linear.1} parent=0 // pred_check_branch
    %472 = sbr.rel (0) target = $region25
  $region24: #{svd_linear.1} parent=0 // pred_region
    _
  $region25: #{svd_linear.1} parent=0 // pred_fallthru
    _
  // Predicated region
  $region26: #{svd_linear.1} parent=0 // pred_check
    _
  $region27: #{svd_linear.1} parent=0 // pred_check_branch
    %474 = sbr.rel (0) target = $region29
  $region28: #{svd_linear.1} parent=0 // pred_region
    _
  $region29: #{svd_linear.1} parent=0 // pred_fallthru
    _

</llo_original>
